<compile_context>
chip_gen: v5e
topology: v5e:2x2
jax: 0.10.0
libtpu: 0.0.40
codegen_flags: <defaults>
</compile_context>

<pallas_src>
import functools

import jax
import jax.numpy as jnp
from jax.experimental import pallas as pl
from jax.experimental.pallas import tpu as pltpu

_LANE = 128


def crop_like(src, tgt):
    """Center-crop src's spatial dims (H, W of NCHW) to match tgt."""
    sh, sw = src.shape[2], src.shape[3]
    th_, tw = tgt.shape[2], tgt.shape[3]
    ch, cw = (sh - th_) // 2, (sw - tw) // 2
    if ch > 0 or cw > 0:
        return src[:, :, ch:ch + th_, cw:cw + tw]
    return src


def _sse_kernel(out_ref, tgt_ref, part_ref, acc_ref, *,
                total_rows, tile_rows, acc_rows, steps_per_shard, mask_needed):
    """Accumulate partial sum-of-squared-errors per shard.

    Grid: (num_shards ["parallel"], steps_per_shard ["arbitrary"]).
    Writes each shard's raw (acc_rows, 128) accumulator to part_ref; the final
    cross-lane reduce, tail add, divide and log10 happen in the wrapper.
    """
    c = pl.program_id(0)                 # shard (megacore parallel axis)
    i = pl.program_id(1)                 # streaming / reduction step
    gi = c * steps_per_shard + i         # global (unclamped) block index

    @pl.when(i == 0)
    def _():
        acc_ref[...] = jnp.zeros_like(acc_ref)

    # Upcast in-kernel; inputs stream in their native dtype.
    d = out_ref[...].astype(jnp.float32) - tgt_ref[...].astype(jnp.float32)
    sq = d * d

    def accumulate(vals):
        # Fold tile rows onto acc_rows sublanes: acc_rows//8 independent
        # accumulator vregs -> no long serial vadd chain, no cross-lane work
        # in the hot loop.
        acc_ref[...] += vals.reshape(
            tile_rows // acc_rows, acc_rows, _LANE).sum(axis=0)

    if mask_needed:
        full_blocks = total_rows // tile_rows

        @pl.when(gi < full_blocks)       # hot path: no mask work at all
        def _():
            accumulate(sq)

        @pl.when(gi >= full_blocks)      # ragged last block / shard padding
        def _():
            row = jax.lax.broadcasted_iota(jnp.int32, sq.shape, 0)
            valid = (gi * tile_rows + row) < total_rows
            # Select (not multiply) so stale/garbage VMEM rows never propagate.
            accumulate(jnp.where(valid, sq, 0.0))
    else:
        accumulate(sq)

    @pl.when(i == steps_per_shard - 1)
    def _():
        part_ref[0] = acc_ref[...]


def _pick_tile_rows(rows, itemsize, block_bytes):
    """Largest row tile <= rows, multiple of 8, ~block_bytes per input block."""
    if rows < 8:
        return rows                       # block == full array dim (allowed)
    target = max(8, block_bytes // (_LANE * itemsize))
    tile = min(target, rows)
    return max(8, (tile // 8) * 8)


def _pick_acc_rows(tile_rows):
    for r in (64, 32, 16, 8):
        if tile_rows % r == 0:
            return r
    return tile_rows


def psnr_pallas(target_full, output, *, tile_rows=None, block_bytes=4 << 20):
    """PSNR between `output` and center-cropped `target_full` (both NCHW)."""
    target = crop_like(target_full, output)
    assert target.shape == output.shape, (target.shape, output.shape)

    n = output.size
    o_flat = output.reshape(-1)
    t_flat = target.reshape(-1)

    n_main = (n // _LANE) * _LANE
    sse = jnp.float32(0.0)

    if n_main:
        rows = n_main // _LANE
        o2 = o_flat[:n_main].reshape(rows, _LANE)
        t2 = t_flat[:n_main].reshape(rows, _LANE)

        itemsize = max(o2.dtype.itemsize, t2.dtype.itemsize)
        if tile_rows is None:
            tr = _pick_tile_rows(rows, itemsize, block_bytes)
        else:
            tr = min(int(tile_rows), rows)
            if rows >= 8:
                tr = max(8, (tr // 8) * 8)
        acc_rows = _pick_acc_rows(tr)

        num_blocks = pl.cdiv(rows, tr)
        num_shards = 2 if num_blocks >= 2 else 1   # v7x: 2 TCs; no-op on 1-TC chips
        steps = pl.cdiv(num_blocks, num_shards)
        mask_needed = (rows % tr != 0) or (num_blocks % num_shards != 0)

        if num_blocks % num_shards == 0:
            def in_map(c, i):
                return (c * steps + i, 0)
        else:
            # Clamp shard-padding steps onto the last real block; the in-kernel
            # mask zeroes their contribution.
            def in_map(c, i):
                return (jnp.minimum(c * steps + i, num_blocks - 1), 0)

        kernel = functools.partial(
            _sse_kernel,
            total_rows=rows, tile_rows=tr, acc_rows=acc_rows,
            steps_per_shard=steps, mask_needed=mask_needed)

        block_in_bytes = tr * _LANE * itemsize
        # 2 inputs x 2 pipeline buffers + headroom; raises v5e's 16 MiB default
        # scoped limit when needed, stays well under v7x's 64 MiB physical.
        vmem_limit = max(int(4 * block_in_bytes + (4 << 20)), 16 << 20)

        partials = pl.pallas_call(
            kernel,
            out_shape=jax.ShapeDtypeStruct(
                (num_shards, acc_rows, _LANE), jnp.float32),
            grid_spec=pltpu.PrefetchScalarGridSpec(
                num_scalar_prefetch=0,
                grid=(num_shards, steps),
                in_specs=[
                    pl.BlockSpec((tr, _LANE), in_map),
                    pl.BlockSpec((tr, _LANE), in_map),
                ],
                out_specs=pl.BlockSpec(
                    (1, acc_rows, _LANE), lambda c, i: (c, 0, 0)),
                scratch_shapes=[pltpu.VMEM((acc_rows, _LANE), jnp.float32)],
            ),
            compiler_params=pltpu.CompilerParams(
                dimension_semantics=("parallel", "arbitrary"),
                vmem_limit_bytes=vmem_limit,
            ),
            cost_estimate=pl.CostEstimate(
                flops=3 * n_main,
                transcendentals=0,
                bytes_accessed=n_main * (o2.dtype.itemsize + t2.dtype.itemsize),
            ),
        )(o2, t2)
        sse = jnp.sum(partials)

    if n_main < n:
        # <128-element ragged tail in plain JAX: no padded copy of the inputs.
        do = o_flat[n_main:].astype(jnp.float32) - t_flat[n_main:].astype(jnp.float32)
        sse = sse + jnp.sum(do * do)

    mse = sse / n
    return -10.0 * jnp.log(mse) / jnp.log(10.0)


def _psnr_reference(target_full, output):
    target = crop_like(target_full, output)
    mse = jnp.mean((output.astype(jnp.float32) - target.astype(jnp.float32)) ** 2)
    return -10.0 * jnp.log(mse) / jnp.log(10.0)


def _check(name, got, want):
    if not jnp.allclose(got, want, rtol=1e-4, atol=1e-4):
        raise AssertionError(f"mismatch ({name}): pallas={got} ref={want}")


if __name__ == "__main__":
    key = jax.random.PRNGKey(0)
    ks = jax.random.split(key, 8)

    # data['target'] is larger; output is the network prediction (center crop).
    target = jax.random.uniform(ks[0], (2, 4, 20, 20), dtype=jnp.float32)
    output = jax.random.uniform(ks[1], (2, 4, 16, 16), dtype=jnp.float32)
    res = jax.block_until_ready(psnr_pallas(target, output))
    ref = jax.block_until_ready(_psnr_reference(target, output))
    _check("basic", res, ref)

    # Multi-block + 2-shard + ragged-last-block + shard-padding path
    # (forced small tile so the sharded/masked branches run at test scale).
    target2 = jax.random.uniform(ks[2], (2, 4, 20, 24), dtype=jnp.float32)
    output2 = jax.random.uniform(ks[3], (2, 4, 16, 20), dtype=jnp.float32)  # 2560 elems -> 20 rows
    res2 = jax.block_until_ready(psnr_pallas(target2, output2, tile_rows=8))
    ref2 = jax.block_until_ready(_psnr_reference(target2, output2))
    _check("sharded+ragged", res2, ref2)

    # Non-multiple-of-128 element count: JAX tail path + tiny-row kernel path.
    target3 = jax.random.uniform(ks[4], (1, 3, 13, 15), dtype=jnp.float32)
    output3 = jax.random.uniform(ks[5], (1, 3, 9, 11), dtype=jnp.float32)   # 297 elems
    res3 = jax.block_until_ready(psnr_pallas(target3, output3))
    ref3 = jax.block_until_ready(_psnr_reference(target3, output3))
    _check("tail", res3, ref3)

    print("KERNEL_OK")
</pallas_src>

<mosaic_0001>
module attributes {stable_mosaic.version = 11 : i64} {
  func.func @_sse_kernel(%arg0: i32, %arg1: i32, %arg2: memref<16x128xf32, #tpu.memory_space<vmem>>, %arg3: memref<16x128xf32, #tpu.memory_space<vmem>>, %arg4: memref<1x16x128xf32, #tpu.memory_space<vmem>>, %arg5: memref<16x128xf32, #tpu.memory_space<vmem>>) attributes {dimension_semantics = [#tpu.dimension_semantics<parallel>, #tpu.dimension_semantics<arbitrary>], iteration_bounds = array<i64: 1, 1>, scalar_prefetch = 0 : i64, scratch_operands = 1 : i64, tpu.core_type = #tpu.core_type<tc>, window_params = [{transform_indices = @transform_0, window_bounds = array<i64: 16, 128>}, {transform_indices = @transform_1, window_bounds = array<i64: 16, 128>}, {transform_indices = @transform_2, window_bounds = array<i64: 1, 16, 128>}]} {
    %c0_i32 = arith.constant 0 : i32
    %0 = arith.cmpi eq, %arg1, %c0_i32 : i32
    %1 = arith.extui %0 : i1 to i32
    %c0_i32_0 = arith.constant 0 : i32
    %2 = arith.cmpi ne, %1, %c0_i32_0 : i32
    scf.if %2 {
      %cst_10 = arith.constant 0.000000e+00 : f32
      %15 = vector.broadcast %cst_10 : f32 to vector<16x128xf32>
      %c0_11 = arith.constant 0 : index
      %c0_12 = arith.constant 0 : index
      %16 = vector.load %arg5[%c0_11, %c0_12] : memref<16x128xf32, #tpu.memory_space<vmem>>, vector<16x128xf32>
      tpu.vector_store %arg5[%c0_11, %c0_12], %15 {strides = array<i32>} : memref<16x128xf32, #tpu.memory_space<vmem>>, vector<16x128xf32>,
    } else {
    }
    %c0 = arith.constant 0 : index
    %c0_1 = arith.constant 0 : index
    %3 = vector.load %arg2[%c0, %c0_1] : memref<16x128xf32, #tpu.memory_space<vmem>>, vector<16x128xf32>
    %c0_2 = arith.constant 0 : index
    %c0_3 = arith.constant 0 : index
    %4 = vector.load %arg3[%c0_2, %c0_3] : memref<16x128xf32, #tpu.memory_space<vmem>>, vector<16x128xf32>
    %5 = arith.subf %3, %4 : vector<16x128xf32>
    %6 = arith.mulf %5, %5 : vector<16x128xf32>
    %c0_4 = arith.constant 0 : index
    %c0_5 = arith.constant 0 : index
    %7 = vector.load %arg5[%c0_4, %c0_5] : memref<16x128xf32, #tpu.memory_space<vmem>>, vector<16x128xf32>
    %8 = vector.shape_cast %6 : vector<16x128xf32> to vector<1x16x128xf32>
    %cst = arith.constant dense<0.000000e+00> : vector<16x128xf32>
    %9 = vector.multi_reduction <add>, %8, %cst [0] : vector<1x16x128xf32> to vector<16x128xf32>
    %10 = arith.addf %7, %9 : vector<16x128xf32>
    %c0_6 = arith.constant 0 : index
    %c0_7 = arith.constant 0 : index
    %11 = vector.load %arg5[%c0_6, %c0_7] : memref<16x128xf32, #tpu.memory_space<vmem>>, vector<16x128xf32>
    tpu.vector_store %arg5[%c0_6, %c0_7], %10 {strides = array<i32>} : memref<16x128xf32, #tpu.memory_space<vmem>>, vector<16x128xf32>,
    %c0_i32_8 = arith.constant 0 : i32
    %12 = arith.cmpi eq, %arg1, %c0_i32_8 : i32
    %13 = arith.extui %12 : i1 to i32
    %c0_i32_9 = arith.constant 0 : i32
    %14 = arith.cmpi ne, %13, %c0_i32_9 : i32
    scf.if %14 {
      %c0_10 = arith.constant 0 : index
      %c0_11 = arith.constant 0 : index
      %15 = vector.load %arg5[%c0_10, %c0_11] : memref<16x128xf32, #tpu.memory_space<vmem>>, vector<16x128xf32>
      %c0_12 = arith.constant 0 : index
      %c0_13 = arith.constant 0 : index
      %c0_14 = arith.constant 0 : index
      %16 = vector.load %arg4[%c0_12, %c0_13, %c0_14] : memref<1x16x128xf32, #tpu.memory_space<vmem>>, vector<1x16x128xf32>
      %17 = vector.shape_cast %16 : vector<1x16x128xf32> to vector<16x128xf32>
      %18 = vector.shape_cast %15 : vector<16x128xf32> to vector<1x16x128xf32>
      tpu.vector_store %arg4[%c0_12, %c0_13, %c0_14], %18 {strides = array<i32>} : memref<1x16x128xf32, #tpu.memory_space<vmem>>, vector<1x16x128xf32>,
    } else {
    }
    return
  }
  func.func @transform_0(%arg0: i32, %arg1: i32) -> (i32, i32) {
    %c1_i32 = arith.constant 1 : i32
    %0 = arith.muli %arg0, %c1_i32 : i32
    %1 = arith.addi %0, %arg1 : i32
    %c0_i32 = arith.constant 0 : i32
    %c0_i32_0 = arith.constant 0 : i32
    return %1, %c0_i32 : i32, i32
  }
  func.func @transform_1(%arg0: i32, %arg1: i32) -> (i32, i32) {
    %c1_i32 = arith.constant 1 : i32
    %0 = arith.muli %arg0, %c1_i32 : i32
    %1 = arith.addi %0, %arg1 : i32
    %c0_i32 = arith.constant 0 : i32
    %c0_i32_0 = arith.constant 0 : i32
    return %1, %c0_i32 : i32, i32
  }
  func.func @transform_2(%arg0: i32, %arg1: i32) -> (i32, i32, i32) {
    %c0_i32 = arith.constant 0 : i32
    %c0_i32_0 = arith.constant 0 : i32
    %c0_i32_1 = arith.constant 0 : i32
    return %arg0, %c0_i32, %c0_i32_0 : i32, i32, i32
  }
}

</mosaic_0001>

<llo_original>
// kernel: tpu_custom_call.1
$region0: #{tpu_custom_call.1}
  #allocation0 [shape = 'u32[]', space=smem, size = 0x4, offset = 0x4, fixed_abs, tag = 'smem constant byte address 0x4 - core index']
  #allocation1 [shape = 'u32[72,128]{1,0:T(1,128)}', space=vmem, size = 0x9000, scoped, tag = 'internal scratch']
  #allocation2 [shape = 'f32[16,128]{1,0:T(8,128)}', space=vmem, size = 0x2000, scoped, tag = 'scratch operand']
  %s0 = inlined_call_operand.hbm [shape: f32[16,128], index: 0, kind: input, shape index: {}]
  %s1 = inlined_call_operand.hbm [shape: f32[16,128], index: 1, kind: input, shape index: {}]
  %s2 = inlined_call_operand.hbm [shape: f32[1,16,128], index: 2, kind: output, shape index: {}]
  %s3 = sld [smem:[#allocation0]]
  $region34: #{tpu_custom_call.1} parent=0
    _
  %s5 = ssub.s32 1, %s3
  %s6 = scalar_select 0, %s5, %s3
  $region1: #{tpu_custom_call.1} parent=0
    #allocation3 [shape = 'u8[8192]{0}', space=vmem, size = 0x2000, scoped, tag = 'input window, operand 0, single buffered']
    #allocation4 [shape = 's32[1]{0}', space=sflag, size = 0x4, scoped, tag = 'scoped memory for tpu_custom_call.1']
    #allocation5 [shape = 's32[1]{0}', space=sflag, size = 0x4, scoped, tag = 'scoped memory for tpu_custom_call.1']
    #allocation6 [shape = 'u8[8192]{0}', space=vmem, size = 0x2000, scoped, tag = 'input window, operand 1, single buffered']
    #allocation7 [shape = 's32[1]{0}', space=sflag, size = 0x4, scoped, tag = 'scoped memory for tpu_custom_call.1']
    #allocation8 [shape = 'u8[8192]{0}', space=vmem, size = 0x2000, scoped, tag = 'output window, operand 0, single buffered']
    %7 = vsyncpa [#allocation4], 0
    %8 = vsyncpa [#allocation7], 0
    %9 = vsyncpa [#allocation5], 0
    // Predicated region
    $region2: #{tpu_custom_call.1} parent=1 // pred_check
      _
    $region3: #{tpu_custom_call.1} parent=1 // pred_check_branch
      %11 = sbr.rel (0) target = $region5
    $region4: #{tpu_custom_call.1} parent=1 // pred_region
      %s12 = sadd.s32 0, 0
      %s13 = smul.u32 2, %s12
      %15 = vsyncadd [#allocation4], 0
      %s16 = smul.addr %s13, 8
      %s17 = scalar_lea.hbm %s0, %s16
      %s18 = sshll.u32 %s17, 4
      %s19 = int_to_ptr.hbm [resolvable:$true] %s18
      %s20 = sshll.u32 [#allocation3], 4
      %s21 = int_to_ptr.vmem [resolvable:$true] %s20
      %26 = dma.hbm_to_vmem [thread:$0]  %s19, 256, %s21, [#allocation4], 128, 128, 8
    $region5: #{tpu_custom_call.1} parent=1 // pred_fallthru
      _
    // Predicated region
    $region6: #{tpu_custom_call.1} parent=1 // pred_check
      _
    $region7: #{tpu_custom_call.1} parent=1 // pred_check_branch
      %28 = sbr.rel (0) target = $region9
    $region8: #{tpu_custom_call.1} parent=1 // pred_region
      %s29 = sadd.s32 0, 0
      %s30 = smul.u32 2, %s29
      %32 = vsyncadd [#allocation7], 0
      %s33 = smul.addr %s30, 8
      %s34 = scalar_lea.hbm %s1, %s33
      %s35 = sshll.u32 %s34, 4
      %s36 = int_to_ptr.hbm [resolvable:$true] %s35
      %s37 = sshll.u32 [#allocation6], 4
      %s38 = int_to_ptr.vmem [resolvable:$true] %s37
      %43 = dma.hbm_to_vmem [thread:$0]  %s36, 256, %s38, [#allocation7], 128, 128, 8
    $region9: #{tpu_custom_call.1} parent=1 // pred_fallthru
      _
    // Predicated region
    $region10: #{tpu_custom_call.1} parent=1 // pred_check
      _
    $region11: #{tpu_custom_call.1} parent=1 // pred_check_branch
      %45 = sbr.rel (0) target = $region13
    $region12: #{tpu_custom_call.1} parent=1 // pred_region
      %47 = dma.done [#allocation4], 256
    $region13: #{tpu_custom_call.1} parent=1 // pred_fallthru
      _
    // Predicated region
    $region14: #{tpu_custom_call.1} parent=1 // pred_check
      _
    $region15: #{tpu_custom_call.1} parent=1 // pred_check_branch
      %49 = sbr.rel (0) target = $region17
    $region16: #{tpu_custom_call.1} parent=1 // pred_region
      %51 = dma.done [#allocation7], 256
    $region17: #{tpu_custom_call.1} parent=1 // pred_fallthru
      _
    %s52 = sadd.s32 0, 0
    %s53 = smul.u32 2, %s52
    %s54 = sadd.s32 0, 0
    %s55 = smul.u32 2, %s54
    %p56 = scmp.eq.s32.totalorder 0, 0
    // Predicated region
    $region18: #{tpu_custom_call.1} parent=1 // pred_check
      %p57 = pneg %p56
    $region19: #{tpu_custom_call.1} parent=1 // pred_check_branch
      %59 = sbr.rel (%p57) target = $region21
    $region20: #{tpu_custom_call.1} parent=1 // pred_region
      %60 = vst [vmem:[#allocation2] sm:$0xff] 0.0
      %61 = vst [vmem:[#allocation2 + $0x8] sm:$0xff] 0.0
    $region21: #{tpu_custom_call.1} parent=1 // pred_fallthru
      _
    %v62 = vld [vmem:[#allocation3] sm:$0xff]
    %v63 = vld [vmem:[#allocation3 + $0x8] sm:$0xff]
    %v64 = vld [vmem:[#allocation6] sm:$0xff]
    %v65 = vld [vmem:[#allocation6 + $0x8] sm:$0xff]
    %v66 = vsub.f32 %v62, %v64
    %v67 = vsub.f32 %v63, %v65
    %v68 = vmul.f32 %v66, %v66
    %v69 = vmul.f32 %v67, %v67
    %v70 = vld [vmem:[#allocation2] sm:$0xff]
    %v71 = vld [vmem:[#allocation2 + $0x8] sm:$0xff]
    %v72 = vadd.f32 %v68, 0.0
    %v73 = vadd.f32 %v69, 0.0
    %v74 = vadd.f32 %v70, %v72
    %v75 = vadd.f32 %v71, %v73
    %76 = vst [vmem:[#allocation2] sm:$0xff] %v74
    %77 = vst [vmem:[#allocation2 + $0x8] sm:$0xff] %v75
    // Predicated region
    $region22: #{tpu_custom_call.1} parent=1 // pred_check
      %p78 = pneg %p56
    $region23: #{tpu_custom_call.1} parent=1 // pred_check_branch
      %80 = sbr.rel (%p78) target = $region25
    $region24: #{tpu_custom_call.1} parent=1 // pred_region
      %v81 = vld [vmem:[#allocation2] sm:$0xff]
      %v82 = vld [vmem:[#allocation2 + $0x8] sm:$0xff]
      %83 = vst [vmem:[#allocation8] sm:$0xff] %v81
      %84 = vst [vmem:[#allocation8 + $0x8] sm:$0xff] %v82
    $region25: #{tpu_custom_call.1} parent=1 // pred_fallthru
      _
    // Predicated region
    $region26: #{tpu_custom_call.1} parent=1 // pred_check
      _
    $region27: #{tpu_custom_call.1} parent=1 // pred_check_branch
      %86 = sbr.rel (0) target = $region29
    $region28: #{tpu_custom_call.1} parent=1 // pred_region
      %88 = vsyncadd [#allocation5], 0
      %s89 = sshll.u32 [#allocation8], 4
      %s90 = int_to_ptr.vmem [resolvable:$true] %s89
      %s91 = sshll.u32 %s2, 4
      %s92 = int_to_ptr.hbm [resolvable:$true] %s91
      %97 = dma.vmem_to_hbm [thread:$0]  %s90, 256, %s92, [#allocation5], 128, 128, 8
    $region29: #{tpu_custom_call.1} parent=1 // pred_fallthru
      _
    // Predicated region
    $region30: #{tpu_custom_call.1} parent=1 // pred_check
      _
    $region31: #{tpu_custom_call.1} parent=1 // pred_check_branch
      %99 = sbr.rel (0) target = $region33
    $region32: #{tpu_custom_call.1} parent=1 // pred_region
      %101 = dma.done [#allocation5], 256
    $region33: #{tpu_custom_call.1} parent=1 // pred_fallthru
      _
    %102 = vsyncpa [#allocation4], 1
    %103 = vsyncpa [#allocation7], 1
    %104 = vsyncpa [#allocation5], 1

</llo_original>
